<compile_context>
chip_gen: v5e
topology: v5e:2x2
jax: 0.10.0
libtpu: 0.0.40
codegen_flags: <defaults>
</compile_context>

<pallas_src>
import functools
import math

import jax
import jax.numpy as jnp
from jax.experimental import pallas as pl
from jax.experimental.pallas import tpu as pltpu


def _self_attn_kernel(tq,
                      x_ref, v_ref,
                      wqt_ref, bq_ref,
                      wk_ref, bk_ref,
                      wvt_ref, bv_ref,
                      out_ref, attn_ref,
                      k_sc, v_sc):
    """Per grid step: one batch `b`, one query tile `qi` of size tq.

    x_ref : (1, N, C)  bf16, resident across the qi axis (same block index)
    v_ref : (1, Ck, N) bf16, resident across the qi axis
    wqt/wvt : pre-transposed weights (Cin, Cout) bf16; wk kept as (Cq, Ck)
    out_ref  : (1, tq, C) f32 ; attn_ref : (1, tq, N) f32
    k_sc : (Cq, N) bf16 scratch ; v_sc : (N, C) bf16 scratch
    """
    qi = pl.program_id(1)

    # ---- K / V projections: compute once per batch, reuse across query tiles.
    @pl.when(qi == 0)
    def _():
        # K = Wk @ v  -> stored directly in (Cq, N) layout.
        k = jnp.dot(wk_ref[...], v_ref[0],
                    preferred_element_type=jnp.float32) + bk_ref[...]
        k_sc[...] = k.astype(k_sc.dtype)                                # (Cq, N)
        # V = x @ Wv^T -> (N, C)
        val = jnp.dot(x_ref[0], wvt_ref[...],
                      preferred_element_type=jnp.float32) + bv_ref[...]
        v_sc[...] = val.astype(v_sc.dtype)                              # (N, C)

    # ---- Q projection for this query tile only (1/sqrt(Cq) folded in wrapper).
    row0 = pl.multiple_of(qi * tq, tq)
    xq = x_ref[0, pl.ds(row0, tq), :]                                   # (tq, C) bf16
    q = (jnp.dot(xq, wqt_ref[...], preferred_element_type=jnp.float32)
         + bq_ref[...]).astype(jnp.bfloat16)                            # (tq, Cq)

    # ---- energy = Q @ K  (canonical contraction; K already (Cq, N))
    energy = jnp.dot(q, k_sc[...], preferred_element_type=jnp.float32)  # (tq, N) f32

    # ---- stable softmax over keys
    m = jnp.max(energy, axis=-1, keepdims=True)
    e = jnp.exp(energy - m)
    l = jnp.sum(e, axis=-1, keepdims=True)
    att = e * pl.reciprocal(l, approx=True)                             # (tq, N) f32

    attn_ref[0] = att.astype(attn_ref.dtype)
    # out[i, c] = sum_j att[i, j] * V[j, c]   (== bmm(proj_value, attention^T))
    out_ref[0] = jnp.dot(att.astype(jnp.bfloat16), v_sc[...],
                         preferred_element_type=jnp.float32).astype(out_ref.dtype)


def _pick_tq(n):
    """Largest query tile that divides N and keeps the double-buffered
    (tq, N) f32 attention output tile <= ~8 MiB."""
    candidates = [t for t in (512, 256, 128) if n % t == 0]
    if not candidates:
        return n   # small / unaligned N: single full tile (no partial-tile masking)
    fitting = [t for t in candidates if t * n * 4 * 2 <= (8 << 20)]
    return max(fitting) if fitting else min(candidates)


def self_attn(x, v, params, tq=None):
    """x: (B, C, W, H) NCHW ; v: (B, Ck, W, H) NCHW.

    Returns (out NCHW f32, attention (B, N, N) f32)."""
    B, C, W, H = x.shape
    Ck = v.shape[1]
    N = W * H
    Cq = params["wq"].shape[0]          # = C // 8
    scale = 1.0 / math.sqrt(Cq)

    if tq is None:
        tq = _pick_tq(N)
    assert N % tq == 0
    nq = N // tq

    cdt = jnp.bfloat16                  # MXU operand dtype (f32 accumulation)

    # x: NCHW -> (B, N, C) bf16 (single fused XLA transpose+cast).
    x_nc = x.reshape(B, C, N).transpose(0, 2, 1).astype(cdt)
    # v stays channel-major (B, Ck, N): K is built directly as (Cq, N) in-kernel.
    v_cn = v.reshape(B, Ck, N).astype(cdt)

    # Pre-transpose Wq/Wv to (Cin, Cout); fold 1/sqrt(Cq) into Wq/bq.
    wq_t = (params["wq"].T * scale).astype(cdt)                 # (C, Cq)
    bq = (params["bq"].reshape(1, Cq) * scale).astype(jnp.float32)
    wk = params["wk"].astype(cdt)                               # (Cq, Ck)
    bk = params["bk"].reshape(Cq, 1).astype(jnp.float32)
    wv_t = params["wv"].T.astype(cdt)                           # (C, C)
    bv = params["bv"].reshape(1, C).astype(jnp.float32)

    kernel = functools.partial(_self_attn_kernel, tq)

    out_nc, attn = pl.pallas_call(
        kernel,
        out_shape=(jax.ShapeDtypeStruct((B, N, C), jnp.float32),
                   jax.ShapeDtypeStruct((B, N, N), jnp.float32)),
        grid=(B, nq),
        in_specs=[
            # x, v: full per-batch blocks; same block index across qi => resident.
            pl.BlockSpec((1, N, C),  lambda b, qi: (b, 0, 0)),
            pl.BlockSpec((1, Ck, N), lambda b, qi: (b, 0, 0)),
            pl.BlockSpec((C, Cq),    lambda b, qi: (0, 0)),   # Wq^T * scale
            pl.BlockSpec((1, Cq),    lambda b, qi: (0, 0)),   # bq * scale
            pl.BlockSpec((Cq, Ck),   lambda b, qi: (0, 0)),   # Wk
            pl.BlockSpec((Cq, 1),    lambda b, qi: (0, 0)),   # bk
            pl.BlockSpec((C, C),     lambda b, qi: (0, 0)),   # Wv^T
            pl.BlockSpec((1, C),     lambda b, qi: (0, 0)),   # bv
        ],
        out_specs=(pl.BlockSpec((1, tq, C), lambda b, qi: (b, qi, 0)),
                   pl.BlockSpec((1, tq, N), lambda b, qi: (b, qi, 0))),
        scratch_shapes=[pltpu.VMEM((Cq, N), cdt),   # K cache (per batch)
                        pltpu.VMEM((N, C), cdt)],   # V cache (per batch)
        compiler_params=pltpu.CompilerParams(
            # qi axis must be sequential ("arbitrary"): K/V scratch is filled at
            # qi == 0 and reused by later query tiles of the same batch.
            dimension_semantics=("parallel", "arbitrary"),
            vmem_limit_bytes=48 * 1024 * 1024),
    )(x_nc, v_cn, wq_t, bq, wk, bk, wv_t, bv)

    out = out_nc.transpose(0, 2, 1).reshape(B, C, W, H)
    return out, attn


def _reference(x, v, params):
    """Pure-JAX f32 reference mirroring the PyTorch forward."""
    B, C, W, H = x.shape
    Ck = v.shape[1]
    N = W * H
    Cq = params["wq"].shape[0]
    x_f = x.reshape(B, C, N)
    v_f = v.reshape(B, Ck, N)
    q = jnp.einsum("oc,bcn->bon", params["wq"], x_f) + params["bq"].reshape(1, Cq, 1)
    k = jnp.einsum("oc,bcn->bon", params["wk"], v_f) + params["bk"].reshape(1, Cq, 1)
    val = jnp.einsum("oc,bcn->bon", params["wv"], x_f) + params["bv"].reshape(1, C, 1)
    energy = jnp.einsum("bcn,bcm->bnm", q, k) / math.sqrt(Cq)
    att = jax.nn.softmax(energy, axis=-1)
    out = jnp.einsum("bcn,bmn->bcm", val, att).reshape(B, C, W, H)
    return out, att


def _make_params(key, in_dim, key_in_dim):
    Cq = in_dim // 8
    k1, k2, k3, k4, k5, k6 = jax.random.split(key, 6)
    return {
        "wq": 0.1 * jax.random.normal(k1, (Cq, in_dim), dtype=jnp.float32),
        "bq": 0.1 * jax.random.normal(k2, (1, Cq), dtype=jnp.float32),
        "wk": 0.1 * jax.random.normal(k3, (Cq, key_in_dim), dtype=jnp.float32),
        "bk": 0.1 * jax.random.normal(k4, (1, Cq), dtype=jnp.float32),
        "wv": 0.1 * jax.random.normal(k5, (in_dim, in_dim), dtype=jnp.float32),
        "bv": 0.1 * jax.random.normal(k6, (1, in_dim), dtype=jnp.float32),
    }


def _check(x, v, params, tq=None, out_tol=3e-2, attn_tol=5e-3):
    out, attn = self_attn(x, v, params, tq=tq)
    out = jax.block_until_ready(out)
    attn = jax.block_until_ready(attn)
    out_ref, attn_ref = _reference(x, v, params)
    assert jnp.allclose(out, out_ref, atol=out_tol, rtol=out_tol), (
        float(jnp.max(jnp.abs(out - out_ref))))
    assert jnp.allclose(attn, attn_ref, atol=attn_tol), (
        float(jnp.max(jnp.abs(attn - attn_ref))))


if __name__ == "__main__":
    key = jax.random.PRNGKey(0)
    k_a, k_b = jax.random.split(key, 2)

    # Case 1: small shape consistent with the module (single query tile).
    B, in_dim, key_in_dim, Wd, Hd = 2, 16, 8, 4, 4
    kx, kv, kp = jax.random.split(k_a, 3)
    x = jax.random.normal(kx, (B, in_dim, Wd, Hd), dtype=jnp.float32)
    v = jax.random.normal(kv, (B, key_in_dim, Wd, Hd), dtype=jnp.float32)
    params = _make_params(kp, in_dim, key_in_dim)
    _check(x, v, params)

    # Case 2: N = 256 with a forced 128-row query tile -> exercises the tiled
    # path (grid=(B, 2)) and the per-batch K/V scratch reuse.
    B2, in_dim2, key_in_dim2, W2, H2 = 1, 32, 16, 16, 16
    kx2, kv2, kp2 = jax.random.split(k_b, 3)
    x2 = jax.random.normal(kx2, (B2, in_dim2, W2, H2), dtype=jnp.float32)
    v2 = jax.random.normal(kv2, (B2, key_in_dim2, W2, H2), dtype=jnp.float32)
    params2 = _make_params(kp2, in_dim2, key_in_dim2)
    _check(x2, v2, params2, tq=128)

    print("KERNEL_OK")
</pallas_src>

<mosaic_0001>
module attributes {stable_mosaic.version = 11 : i64} {
  func.func @_self_attn_kernel(%arg0: i32, %arg1: i32, %arg2: memref<1x16x16xbf16, #tpu.memory_space<vmem>>, %arg3: memref<1x8x16xbf16, #tpu.memory_space<vmem>>, %arg4: memref<16x2xbf16, #tpu.memory_space<vmem>>, %arg5: memref<1x2xf32, #tpu.memory_space<vmem>>, %arg6: memref<2x8xbf16, #tpu.memory_space<vmem>>, %arg7: memref<2x1xf32, #tpu.memory_space<vmem>>, %arg8: memref<16x16xbf16, #tpu.memory_space<vmem>>, %arg9: memref<1x16xf32, #tpu.memory_space<vmem>>, %arg10: memref<1x16x16xf32, #tpu.memory_space<vmem>>, %arg11: memref<1x16x16xf32, #tpu.memory_space<vmem>>, %arg12: memref<2x16xbf16, #tpu.memory_space<vmem>>, %arg13: memref<16x16xbf16, #tpu.memory_space<vmem>>) attributes {dimension_semantics = [#tpu.dimension_semantics<parallel>, #tpu.dimension_semantics<arbitrary>], iteration_bounds = array<i64: 2, 1>, scalar_prefetch = 0 : i64, scratch_operands = 2 : i64, tpu.core_type = #tpu.core_type<tc>, window_params = [{transform_indices = @transform_0, window_bounds = array<i64: 1, 16, 16>}, {transform_indices = @transform_1, window_bounds = array<i64: 1, 8, 16>}, {pipeline_mode = #tpu.pipeline_mode<synchronous>, transform_indices = @transform_2, window_bounds = array<i64: 16, 2>}, {pipeline_mode = #tpu.pipeline_mode<synchronous>, transform_indices = @transform_3, window_bounds = array<i64: 1, 2>}, {pipeline_mode = #tpu.pipeline_mode<synchronous>, transform_indices = @transform_4, window_bounds = array<i64: 2, 8>}, {pipeline_mode = #tpu.pipeline_mode<synchronous>, transform_indices = @transform_5, window_bounds = array<i64: 2, 1>}, {pipeline_mode = #tpu.pipeline_mode<synchronous>, transform_indices = @transform_6, window_bounds = array<i64: 16, 16>}, {pipeline_mode = #tpu.pipeline_mode<synchronous>, transform_indices = @transform_7, window_bounds = array<i64: 1, 16>}, {transform_indices = @transform_8, window_bounds = array<i64: 1, 16, 16>}, {transform_indices = @transform_9, window_bounds = array<i64: 1, 16, 16>}]} {
    %c0_i32 = arith.constant 0 : i32
    %0 = arith.cmpi eq, %arg1, %c0_i32 : i32
    %1 = arith.extui %0 : i1 to i32
    %c0_i32_0 = arith.constant 0 : i32
    %2 = arith.cmpi ne, %1, %c0_i32_0 : i32
    scf.if %2 {
      %c0_20 = arith.constant 0 : index
      %c0_21 = arith.constant 0 : index
      %35 = vector.load %arg6[%c0_20, %c0_21] : memref<2x8xbf16, #tpu.memory_space<vmem>>, vector<2x8xbf16>
      %c0_22 = arith.constant 0 : index
      %c0_23 = arith.constant 0 : index
      %c0_24 = arith.constant 0 : index
      %36 = vector.load %arg3[%c0_22, %c0_23, %c0_24] : memref<1x8x16xbf16, #tpu.memory_space<vmem>>, vector<1x8x16xbf16>
      %37 = vector.shape_cast %36 : vector<1x8x16xbf16> to vector<8x16xbf16>
      %cst_25 = arith.constant dense<0.000000e+00> : vector<2x16xf32>
      %38 = tpu.matmul %35, %37, %cst_25 {dimension_numbers = #tpu.dot_dimension_numbers<[1], [0], [0], [1], [0, 0, 1, 1], [], []>} : vector<2x8xbf16>, vector<8x16xbf16>, vector<2x16xf32> -> vector<2x16xf32>
      %c0_26 = arith.constant 0 : index
      %c0_27 = arith.constant 0 : index
      %39 = vector.load %arg7[%c0_26, %c0_27] : memref<2x1xf32, #tpu.memory_space<vmem>>, vector<2x1xf32>
      %40 = vector.broadcast %39 : vector<2x1xf32> to vector<2x16xf32>
      %41 = arith.addf %38, %40 : vector<2x16xf32>
      %42 = arith.truncf %41 : vector<2x16xf32> to vector<2x16xbf16>
      %c0_28 = arith.constant 0 : index
      %c0_29 = arith.constant 0 : index
      %43 = vector.load %arg12[%c0_28, %c0_29] : memref<2x16xbf16, #tpu.memory_space<vmem>>, vector<2x16xbf16>
      tpu.vector_store %arg12[%c0_28, %c0_29], %42 {strides = array<i32>} : memref<2x16xbf16, #tpu.memory_space<vmem>>, vector<2x16xbf16>,
      %c0_30 = arith.constant 0 : index
      %c0_31 = arith.constant 0 : index
      %c0_32 = arith.constant 0 : index
      %44 = vector.load %arg2[%c0_30, %c0_31, %c0_32] : memref<1x16x16xbf16, #tpu.memory_space<vmem>>, vector<1x16x16xbf16>
      %45 = vector.shape_cast %44 : vector<1x16x16xbf16> to vector<16x16xbf16>
      %c0_33 = arith.constant 0 : index
      %c0_34 = arith.constant 0 : index
      %46 = vector.load %arg8[%c0_33, %c0_34] : memref<16x16xbf16, #tpu.memory_space<vmem>>, vector<16x16xbf16>
      %cst_35 = arith.constant dense<0.000000e+00> : vector<16x16xf32>
      %47 = tpu.matmul %45, %46, %cst_35 {dimension_numbers = #tpu.dot_dimension_numbers<[1], [0], [0], [1], [0, 0, 1, 1], [], []>} : vector<16x16xbf16>, vector<16x16xbf16>, vector<16x16xf32> -> vector<16x16xf32>
      %c0_36 = arith.constant 0 : index
      %c0_37 = arith.constant 0 : index
      %48 = vector.load %arg9[%c0_36, %c0_37] : memref<1x16xf32, #tpu.memory_space<vmem>>, vector<1x16xf32>
      %49 = vector.broadcast %48 : vector<1x16xf32> to vector<16x16xf32>
      %50 = arith.addf %47, %49 : vector<16x16xf32>
      %51 = arith.truncf %50 : vector<16x16xf32> to vector<16x16xbf16>
      %c0_38 = arith.constant 0 : index
      %c0_39 = arith.constant 0 : index
      %52 = vector.load %arg13[%c0_38, %c0_39] : memref<16x16xbf16, #tpu.memory_space<vmem>>, vector<16x16xbf16>
      tpu.vector_store %arg13[%c0_38, %c0_39], %51 {strides = array<i32>} : memref<16x16xbf16, #tpu.memory_space<vmem>>, vector<16x16xbf16>,
    } else {
    }
    %c16_i32 = arith.constant 16 : i32
    %3 = arith.muli %arg1, %c16_i32 : i32
    %4 = tpu.assume_multiple %3, 16 : i32
    %c0 = arith.constant 0 : index
    %5 = arith.index_cast %4 : i32 to index
    %c0_1 = arith.constant 0 : index
    %6 = vector.load %arg2[%c0, %5, %c0_1] : memref<1x16x16xbf16, #tpu.memory_space<vmem>>, vector<1x16x16xbf16>
    %7 = vector.shape_cast %6 : vector<1x16x16xbf16> to vector<16x16xbf16>
    %c0_2 = arith.constant 0 : index
    %c0_3 = arith.constant 0 : index
    %8 = vector.load %arg4[%c0_2, %c0_3] : memref<16x2xbf16, #tpu.memory_space<vmem>>, vector<16x2xbf16>
    %cst = arith.constant dense<0.000000e+00> : vector<16x2xf32>
    %9 = tpu.matmul %7, %8, %cst {dimension_numbers = #tpu.dot_dimension_numbers<[1], [0], [0], [1], [0, 0, 1, 1], [], []>} : vector<16x16xbf16>, vector<16x2xbf16>, vector<16x2xf32> -> vector<16x2xf32>
    %c0_4 = arith.constant 0 : index
    %c0_5 = arith.constant 0 : index
    %10 = vector.load %arg5[%c0_4, %c0_5] : memref<1x2xf32, #tpu.memory_space<vmem>>, vector<1x2xf32>
    %11 = vector.broadcast %10 : vector<1x2xf32> to vector<16x2xf32>
    %12 = arith.addf %9, %11 : vector<16x2xf32>
    %13 = arith.truncf %12 : vector<16x2xf32> to vector<16x2xbf16>
    %c0_6 = arith.constant 0 : index
    %c0_7 = arith.constant 0 : index
    %14 = vector.load %arg12[%c0_6, %c0_7] : memref<2x16xbf16, #tpu.memory_space<vmem>>, vector<2x16xbf16>
    %cst_8 = arith.constant dense<0.000000e+00> : vector<16x16xf32>
    %15 = tpu.matmul %13, %14, %cst_8 {dimension_numbers = #tpu.dot_dimension_numbers<[1], [0], [0], [1], [0, 0, 1, 1], [], []>} : vector<16x2xbf16>, vector<2x16xbf16>, vector<16x16xf32> -> vector<16x16xf32>
    %cst_9 = arith.constant dense<0xFF800000> : vector<16xf32>
    %16 = vector.multi_reduction <maximumf>, %15, %cst_9 [1] : vector<16x16xf32> to vector<16xf32>
    %17 = vector.shape_cast %16 : vector<16xf32> to vector<16x1xf32>
    %18 = vector.broadcast %17 : vector<16x1xf32> to vector<16x16xf32>
    %19 = arith.subf %15, %18 : vector<16x16xf32>
    %20 = math.exp %19 : vector<16x16xf32>
    %cst_10 = arith.constant dense<0.000000e+00> : vector<16xf32>
    %21 = vector.multi_reduction <add>, %20, %cst_10 [1] : vector<16x16xf32> to vector<16xf32>
    %22 = vector.shape_cast %21 : vector<16xf32> to vector<16x1xf32>
    %23 = tpu.reciprocal %22 {approx = true} : vector<16x1xf32> -> vector<16x1xf32>
    %24 = vector.broadcast %23 : vector<16x1xf32> to vector<16x16xf32>
    %25 = arith.mulf %20, %24 : vector<16x16xf32>
    %c0_11 = arith.constant 0 : index
    %c0_12 = arith.constant 0 : index
    %c0_13 = arith.constant 0 : index
    %26 = vector.load %arg11[%c0_11, %c0_12, %c0_13] : memref<1x16x16xf32, #tpu.memory_space<vmem>>, vector<1x16x16xf32>
    %27 = vector.shape_cast %26 : vector<1x16x16xf32> to vector<16x16xf32>
    %28 = vector.shape_cast %25 : vector<16x16xf32> to vector<1x16x16xf32>
    tpu.vector_store %arg11[%c0_11, %c0_12, %c0_13], %28 {strides = array<i32>} : memref<1x16x16xf32, #tpu.memory_space<vmem>>, vector<1x16x16xf32>,
    %29 = arith.truncf %25 : vector<16x16xf32> to vector<16x16xbf16>
    %c0_14 = arith.constant 0 : index
    %c0_15 = arith.constant 0 : index
    %30 = vector.load %arg13[%c0_14, %c0_15] : memref<16x16xbf16, #tpu.memory_space<vmem>>, vector<16x16xbf16>
    %cst_16 = arith.constant dense<0.000000e+00> : vector<16x16xf32>
    %31 = tpu.matmul %29, %30, %cst_16 {dimension_numbers = #tpu.dot_dimension_numbers<[1], [0], [0], [1], [0, 0, 1, 1], [], []>} : vector<16x16xbf16>, vector<16x16xbf16>, vector<16x16xf32> -> vector<16x16xf32>
    %c0_17 = arith.constant 0 : index
    %c0_18 = arith.constant 0 : index
    %c0_19 = arith.constant 0 : index
    %32 = vector.load %arg10[%c0_17, %c0_18, %c0_19] : memref<1x16x16xf32, #tpu.memory_space<vmem>>, vector<1x16x16xf32>
    %33 = vector.shape_cast %32 : vector<1x16x16xf32> to vector<16x16xf32>
    %34 = vector.shape_cast %31 : vector<16x16xf32> to vector<1x16x16xf32>
    tpu.vector_store %arg10[%c0_17, %c0_18, %c0_19], %34 {strides = array<i32>} : memref<1x16x16xf32, #tpu.memory_space<vmem>>, vector<1x16x16xf32>,
    return
  }
  func.func @transform_0(%arg0: i32, %arg1: i32) -> (i32, i32, i32) {
    %c0_i32 = arith.constant 0 : i32
    %c0_i32_0 = arith.constant 0 : i32
    %c0_i32_1 = arith.constant 0 : i32
    return %arg0, %c0_i32, %c0_i32_0 : i32, i32, i32
  }
  func.func @transform_1(%arg0: i32, %arg1: i32) -> (i32, i32, i32) {
    %c0_i32 = arith.constant 0 : i32
    %c0_i32_0 = arith.constant 0 : i32
    %c0_i32_1 = arith.constant 0 : i32
    return %arg0, %c0_i32, %c0_i32_0 : i32, i32, i32
  }
  func.func @transform_2(%arg0: i32, %arg1: i32) -> (i32, i32) {
    %c0_i32 = arith.constant 0 : i32
    %c0_i32_0 = arith.constant 0 : i32
    %c0_i32_1 = arith.constant 0 : i32
    return %c0_i32, %c0_i32_0 : i32, i32
  }
  func.func @transform_3(%arg0: i32, %arg1: i32) -> (i32, i32) {
    %c0_i32 = arith.constant 0 : i32
    %c0_i32_0 = arith.constant 0 : i32
    %c0_i32_1 = arith.constant 0 : i32
    return %c0_i32, %c0_i32_0 : i32, i32
  }
  func.func @transform_4(%arg0: i32, %arg1: i32) -> (i32, i32) {
    %c0_i32 = arith.constant 0 : i32
    %c0_i32_0 = arith.constant 0 : i32
    %c0_i32_1 = arith.constant 0 : i32
    return %c0_i32, %c0_i32_0 : i32, i32
  }
  func.func @transform_5(%arg0: i32, %arg1: i32) -> (i32, i32) {
    %c0_i32 = arith.constant 0 : i32
    %c0_i32_0 = arith.constant 0 : i32
    %c0_i32_1 = arith.constant 0 : i32
    return %c0_i32, %c0_i32_0 : i32, i32
  }
  func.func @transform_6(%arg0: i32, %arg1: i32) -> (i32, i32) {
    %c0_i32 = arith.constant 0 : i32
    %c0_i32_0 = arith.constant 0 : i32
    %c0_i32_1 = arith.constant 0 : i32
    return %c0_i32, %c0_i32_0 : i32, i32
  }
  func.func @transform_7(%arg0: i32, %arg1: i32) -> (i32, i32) {
    %c0_i32 = arith.constant 0 : i32
    %c0_i32_0 = arith.constant 0 : i32
    %c0_i32_1 = arith.constant 0 : i32
    return %c0_i32, %c0_i32_0 : i32, i32
  }
  func.func @transform_8(%arg0: i32, %arg1: i32) -> (i32, i32, i32) {
    %c0_i32 = arith.constant 0 : i32
    %c0_i32_0 = arith.constant 0 : i32
    return %arg0, %arg1, %c0_i32 : i32, i32, i32
  }
  func.func @transform_9(%arg0: i32, %arg1: i32) -> (i32, i32, i32) {
    %c0_i32 = arith.constant 0 : i32
    %c0_i32_0 = arith.constant 0 : i32
    return %arg0, %arg1, %c0_i32 : i32, i32, i32
  }
}

</mosaic_0001>

<llo_original>
// kernel: tpu_custom_call.1
$region0: #{tpu_custom_call.1}
  #allocation0 [shape = 'u32[]', space=smem, size = 0x4, offset = 0x4, fixed_abs, tag = 'smem constant byte address 0x4 - core index']
  #allocation1 [shape = 'u32[72,128]{1,0:T(1,128)}', space=vmem, size = 0x9000, scoped, tag = 'internal scratch']
  #allocation2 [shape = 'bf16[2,16]{1,0:T(2,128)(2,1)}', space=vmem, size = 0x200, scoped, tag = 'scratch operand']
  #allocation3 [shape = 'bf16[16,16]{1,0:T(8,128)(2,1)}', space=vmem, size = 0x1000, scoped, tag = 'scratch operand']
  %s0 = inlined_call_operand.hbm [shape: bf16[2,16,16], index: 0, kind: input, shape index: {}]
  %s1 = inlined_call_operand.vmem [shape: bf16[2,8,16], index: 1, kind: input, shape index: {}]
  %s2 = inlined_call_operand.vmem [shape: bf16[16,2], index: 2, kind: input, shape index: {}]
  %s3 = inlined_call_operand.vmem [shape: f32[1,2], index: 3, kind: input, shape index: {}]
  %s4 = inlined_call_operand.vmem [shape: bf16[2,8], index: 4, kind: input, shape index: {}]
  %s5 = inlined_call_operand.vmem [shape: f32[2,1], index: 5, kind: input, shape index: {}]
  %s6 = inlined_call_operand.hbm [shape: bf16[16,16], index: 6, kind: input, shape index: {}]
  %s7 = inlined_call_operand.vmem [shape: f32[1,16], index: 7, kind: input, shape index: {}]
  %s8 = inlined_call_operand.hbm [shape: f32[2,16,16], index: 8, kind: output, shape index: {0}]
  %s9 = inlined_call_operand.hbm [shape: f32[2,16,16], index: 9, kind: output, shape index: {1}]
  %10 = xla_tuple %s8, %s9
  %s11 = sld [smem:[#allocation0]]
  $region85: #{tpu_custom_call.1} parent=0
    _
  %s13 = ssub.s32 1, %s11
  %s14 = scalar_select 0, %s13, %s11
  $region1: #{tpu_custom_call.1} parent=0
    #allocation4 [shape = 'u8[8192]{0}', space=vmem, size = 0x2000, scoped, tag = 'input window, operand 0']
    #allocation5 [shape = 's32[2]{0}', space=sflag, size = 0x8, scoped, tag = 'scoped memory for tpu_custom_call.1']
    #allocation6 [shape = 's32[2]{0}', space=sflag, size = 0x8, scoped, tag = 'scoped memory for tpu_custom_call.1']
    #allocation7 [shape = 'u8[4096]{0}', space=vmem, size = 0x1000, scoped, tag = 'input window, operand 6, single buffered']
    #allocation8 [shape = 's32[1]{0}', space=sflag, size = 0x4, scoped, tag = 'scoped memory for tpu_custom_call.1']
    #allocation9 [shape = 'u8[16384]{0}', space=vmem, size = 0x4000, scoped, tag = 'output window, operand 0']
    #allocation10 [shape = 'u8[16384]{0}', space=vmem, size = 0x4000, scoped, tag = 'output window, operand 1']
    #allocation11 [shape = 's32[2]{0}', space=sflag, size = 0x8, scoped, tag = 'scoped memory for tpu_custom_call.1']
    %15 = vsyncpa [#allocation5], 0
    %s16 = scalar_lea.sflag [#allocation5], 1
    %17 = vsyncpa %s16, 0
    %18 = vsyncpa [#allocation8], 0
    %19 = vsyncpa [#allocation6], 0
    %s20 = scalar_lea.sflag [#allocation6], 1
    %21 = vsyncpa %s20, 0
    %22 = vsyncpa [#allocation11], 0
    %s23 = scalar_lea.sflag [#allocation11], 1
    %24 = vsyncpa %s23, 0
    loop: start=0, step=1, limit=4
    $region2: #{tpu_custom_call.1} parent=1 // loop_pre_header
      _
    $region3: #{tpu_custom_call.1} parent=1 // loop_header
      %s26 = sphi 0, %s30
      %p27 = scmp.ge.s32.totalorder %s26, 4
      %s33 = sphi 0, %s45
      %s34 = sphi 0, %s41
      %s35 = sphi 0, %s33
      %s36 = sphi 0, %s34
      %s37 = sphi 0, %s35
      %s38 = sphi 0, %s36
      %s48 = sphi 0, %s50
      %s51 = sphi 0, %s48
      %s52 = sphi 0, %s51
      %s68 = sphi 0, %s52
      %s74 = sphi 0, %s76
      %s77 = sphi 0, %s74
      %s78 = sphi 0, %s77
      %s94 = sphi 0, %s78
      %s98 = sphi 0, %s98
      %s100 = sphi 0, %s98
      %s101 = sphi 0, %s100
      %s115 = sphi 0, %s101
      %s119 = sphi 0, %s119
      %s121 = sphi 0, %s119
      %s122 = sphi 0, %s121
      %s136 = sphi 0, %s122
      %s140 = sphi 0, %s140
      %s142 = sphi 0, %s140
      %s143 = sphi 0, %s142
      %s157 = sphi 0, %s143
      %s161 = sphi 0, %s161
      %s163 = sphi 0, %s161
      %s164 = sphi 0, %s163
      %s178 = sphi 0, %s164
      %s182 = sphi 0, %s182
      %s184 = sphi 0, %s182
      %s185 = sphi 0, %s184
      %s199 = sphi 0, %s185
      %s203 = sphi 0, %s203
      %s205 = sphi 0, %s203
      %s206 = sphi 0, %s205
      %s220 = sphi 0, %s206
      %s228 = sphi 0, %s230
      %s231 = sphi 0, %s228
      %s232 = sphi 0, %s231
      %s248 = sphi 0, %s232
      %s256 = sphi 0, %s258
      %s259 = sphi 0, %s256
      %s260 = sphi 0, %s259
      %s276 = sphi 0, %s260
    $region4: #{tpu_custom_call.1} parent=1 // loop_header_branch
      %29 = sbr.rel (%p27) target = $region8
    $region5: #{tpu_custom_call.1} parent=1 // loop_body
      %s31 = ssub.s32 %s26, 1
      %s32 = ssub.s32 %s26, 2
      %s39 = sadd.s32 1, %s34
      %p40 = scmp.ge.s32.totalorder %s39, 1
      %s41 = scalar_select %p40, 0, %s39
      %s42 = sadd.s32 1, %s33
      %s43 = scalar_select %p40, %s42, %s33
      %p44 = scmp.ge.s32.totalorder %s43, 2
      %s45 = scalar_select %p44, 0, %s43
      %s46 = ssub.s32 %s33, %s45
      %p47 = scmp.eq.s32.totalorder %s46, 0
      %s49 = sadd.s32 %s48, 1
      %s50 = scalar_select %p47, %s48, %s49
      %p53 = pneg %p47
      %p54 = scmp.eq.s32.totalorder %s26, 1
      %p55 = por %p53, %p54
      %p56 = scmp.ne.s32.totalorder %s48, %s51
      %p57 = scmp.eq.s32.totalorder %s26, 0
      %p58 = por %p56, %p57
      %p59 = scmp.ne.s32.totalorder %s48, %s51
      %p60 = scmp.eq.s32.totalorder %s31, 1
      %p61 = por %p59, %p60
      %p62 = scmp.ne.s32.totalorder %s51, %s52
      %p63 = scmp.eq.s32.totalorder %s31, 0
      %p64 = por %p62, %p63
      %p65 = scmp.ne.s32.totalorder %s51, %s52
      %p66 = scmp.eq.s32.totalorder %s32, 1
      %p67 = por %p65, %p66
      %p69 = scmp.ne.s32.totalorder %s52, %s68
      %p70 = scmp.eq.s32.totalorder %s32, 0
      %p71 = por %p69, %p70
      %s72 = ssub.s32 %s33, %s45
      %p73 = scmp.eq.s32.totalorder %s72, 0
      %s75 = sadd.s32 %s74, 1
      %s76 = scalar_select %p73, %s74, %s75
      %p79 = pneg %p73
      %p80 = scmp.eq.s32.totalorder %s26, 1
      %p81 = por %p79, %p80
      %p82 = scmp.ne.s32.totalorder %s74, %s77
      %p83 = scmp.eq.s32.totalorder %s26, 0
      %p84 = por %p82, %p83
      %p85 = scmp.ne.s32.totalorder %s74, %s77
      %p86 = scmp.eq.s32.totalorder %s31, 1
      %p87 = por %p85, %p86
      %p88 = scmp.ne.s32.totalorder %s77, %s78
      %p89 = scmp.eq.s32.totalorder %s31, 0
      %p90 = por %p88, %p89
      %p91 = scmp.ne.s32.totalorder %s77, %s78
      %p92 = scmp.eq.s32.totalorder %s32, 1
      %p93 = por %p91, %p92
      %p95 = scmp.ne.s32.totalorder %s78, %s94
      %p96 = scmp.eq.s32.totalorder %s32, 0
      %p97 = por %p95, %p96
      %s99 = sadd.s32 %s98, 1
      %p102 = scmp.eq.s32.totalorder %s26, 1
      %p103 = scmp.ne.s32.totalorder %s98, %s100
      %p104 = scmp.eq.s32.totalorder %s26, 0
      %p105 = por %p103, %p104
      %p106 = scmp.ne.s32.totalorder %s98, %s100
      %p107 = scmp.eq.s32.totalorder %s31, 1
      %p108 = por %p106, %p107
      %p109 = scmp.ne.s32.totalorder %s100, %s101
      %p110 = scmp.eq.s32.totalorder %s31, 0
      %p111 = por %p109, %p110
      %p112 = scmp.ne.s32.totalorder %s100, %s101
      %p113 = scmp.eq.s32.totalorder %s32, 1
      %p114 = por %p112, %p113
      %p116 = scmp.ne.s32.totalorder %s101, %s115
      %p117 = scmp.eq.s32.totalorder %s32, 0
      %p118 = por %p116, %p117
      %s120 = sadd.s32 %s119, 1
      %p123 = scmp.eq.s32.totalorder %s26, 1
      %p124 = scmp.ne.s32.totalorder %s119, %s121
      %p125 = scmp.eq.s32.totalorder %s26, 0
      %p126 = por %p124, %p125
      %p127 = scmp.ne.s32.totalorder %s119, %s121
      %p128 = scmp.eq.s32.totalorder %s31, 1
      %p129 = por %p127, %p128
      %p130 = scmp.ne.s32.totalorder %s121, %s122
      %p131 = scmp.eq.s32.totalorder %s31, 0
      %p132 = por %p130, %p131
      %p133 = scmp.ne.s32.totalorder %s121, %s122
      %p134 = scmp.eq.s32.totalorder %s32, 1
      %p135 = por %p133, %p134
      %p137 = scmp.ne.s32.totalorder %s122, %s136
      %p138 = scmp.eq.s32.totalorder %s32, 0
      %p139 = por %p137, %p138
      %s141 = sadd.s32 %s140, 1
      %p144 = scmp.eq.s32.totalorder %s26, 1
      %p145 = scmp.ne.s32.totalorder %s140, %s142
      %p146 = scmp.eq.s32.totalorder %s26, 0
      %p147 = por %p145, %p146
      %p148 = scmp.ne.s32.totalorder %s140, %s142
      %p149 = scmp.eq.s32.totalorder %s31, 1
      %p150 = por %p148, %p149
      %p151 = scmp.ne.s32.totalorder %s142, %s143
      %p152 = scmp.eq.s32.totalorder %s31, 0
      %p153 = por %p151, %p152
      %p154 = scmp.ne.s32.totalorder %s142, %s143
      %p155 = scmp.eq.s32.totalorder %s32, 1
      %p156 = por %p154, %p155
      %p158 = scmp.ne.s32.totalorder %s143, %s157
      %p159 = scmp.eq.s32.totalorder %s32, 0
      %p160 = por %p158, %p159
      %s162 = sadd.s32 %s161, 1
      %p165 = scmp.eq.s32.totalorder %s26, 1
      %p166 = scmp.ne.s32.totalorder %s161, %s163
      %p167 = scmp.eq.s32.totalorder %s26, 0
      %p168 = por %p166, %p167
      %p169 = scmp.ne.s32.totalorder %s161, %s163
      %p170 = scmp.eq.s32.totalorder %s31, 1
      %p171 = por %p169, %p170
      %p172 = scmp.ne.s32.totalorder %s163, %s164
      %p173 = scmp.eq.s32.totalorder %s31, 0
      %p174 = por %p172, %p173
      %p175 = scmp.ne.s32.totalorder %s163, %s164
      %p176 = scmp.eq.s32.totalorder %s32, 1
      %p177 = por %p175, %p176
      %p179 = scmp.ne.s32.totalorder %s164, %s178
      %p180 = scmp.eq.s32.totalorder %s32, 0
      %p181 = por %p179, %p180
      %s183 = sadd.s32 %s182, 1
      %p186 = scmp.eq.s32.totalorder %s26, 1
      %p187 = scmp.ne.s32.totalorder %s182, %s184
      %p188 = scmp.eq.s32.totalorder %s26, 0
      %p189 = por %p187, %p188
      %p190 = scmp.ne.s32.totalorder %s182, %s184
      %p191 = scmp.eq.s32.totalorder %s31, 1
      %p192 = por %p190, %p191
      %p193 = scmp.ne.s32.totalorder %s184, %s185
      %p194 = scmp.eq.s32.totalorder %s31, 0
      %p195 = por %p193, %p194
      %p196 = scmp.ne.s32.totalorder %s184, %s185
      %p197 = scmp.eq.s32.totalorder %s32, 1
      %p198 = por %p196, %p197
      %p200 = scmp.ne.s32.totalorder %s185, %s199
      %p201 = scmp.eq.s32.totalorder %s32, 0
      %p202 = por %p200, %p201
      %s204 = sadd.s32 %s203, 1
      %p207 = scmp.eq.s32.totalorder %s26, 1
      %p208 = scmp.ne.s32.totalorder %s203, %s205
      %p209 = scmp.eq.s32.totalorder %s26, 0
      %p210 = por %p208, %p209
      %p211 = scmp.ne.s32.totalorder %s203, %s205
      %p212 = scmp.eq.s32.totalorder %s31, 1
      %p213 = por %p211, %p212
      %p214 = scmp.ne.s32.totalorder %s205, %s206
      %p215 = scmp.eq.s32.totalorder %s31, 0
      %p216 = por %p214, %p215
      %p217 = scmp.ne.s32.totalorder %s205, %s206
      %p218 = scmp.eq.s32.totalorder %s32, 1
      %p219 = por %p217, %p218
      %p221 = scmp.ne.s32.totalorder %s206, %s220
      %p222 = scmp.eq.s32.totalorder %s32, 0
      %p223 = por %p221, %p222
      %s224 = ssub.s32 %s33, %s45
      %s225 = ssub.s32 %s34, %s41
      %s226 = sor.u32 %s224, %s225
      %p227 = scmp.eq.s32.totalorder %s226, 0
      %s229 = sadd.s32 %s228, 1
      %s230 = scalar_select %p227, %s228, %s229
      %p233 = pneg %p227
      %p234 = scmp.eq.s32.totalorder %s26, 1
      %p235 = por %p233, %p234
      %p236 = scmp.ne.s32.totalorder %s228, %s231
      %p237 = scmp.eq.s32.totalorder %s26, 0
      %p238 = por %p236, %p237
      %p239 = scmp.ne.s32.totalorder %s228, %s231
      %p240 = scmp.eq.s32.totalorder %s31, 1
      %p241 = por %p239, %p240
      %p242 = scmp.ne.s32.totalorder %s231, %s232
      %p243 = scmp.eq.s32.totalorder %s31, 0
      %p244 = por %p242, %p243
      %p245 = scmp.ne.s32.totalorder %s231, %s232
      %p246 = scmp.eq.s32.totalorder %s32, 1
      %p247 = por %p245, %p246
      %p249 = scmp.ne.s32.totalorder %s232, %s248
      %p250 = scmp.eq.s32.totalorder %s32, 0
      %p251 = por %p249, %p250
      %s252 = ssub.s32 %s33, %s45
      %s253 = ssub.s32 %s34, %s41
      %s254 = sor.u32 %s252, %s253
      %p255 = scmp.eq.s32.totalorder %s254, 0
      %s257 = sadd.s32 %s256, 1
      %s258 = scalar_select %p255, %s256, %s257
      %p261 = pneg %p255
      %p262 = scmp.eq.s32.totalorder %s26, 1
      %p263 = por %p261, %p262
      %p264 = scmp.ne.s32.totalorder %s256, %s259
      %p265 = scmp.eq.s32.totalorder %s26, 0
      %p266 = por %p264, %p265
      %p267 = scmp.ne.s32.totalorder %s256, %s259
      %p268 = scmp.eq.s32.totalorder %s31, 1
      %p269 = por %p267, %p268
      %p270 = scmp.ne.s32.totalorder %s259, %s260
      %p271 = scmp.eq.s32.totalorder %s31, 0
      %p272 = por %p270, %p271
      %p273 = scmp.ne.s32.totalorder %s259, %s260
      %p274 = scmp.eq.s32.totalorder %s32, 1
      %p275 = por %p273, %p274
      %p277 = scmp.ne.s32.totalorder %s260, %s276
      %p278 = scmp.eq.s32.totalorder %s32, 0
      %p279 = por %p277, %p278
      %p280 = scmp.le.s32.totalorder 1, %s26
      %p281 = scmp.lt.s32.totalorder %s26, 3
      %p282 = pnand %p280, %p281
      %p283 = pneg %p282
      // Predicated region
      $region9: #{tpu_custom_call.1} parent=5 // pred_check
        _
      $region10: #{tpu_custom_call.1} parent=5 // pred_check_branch
        %285 = sbr.rel (%p282) target = $region12
      $region11: #{tpu_custom_call.1} parent=5 // pred_region
        %s286 = ssub.s32 %s26, 1
        // Predicated region
        $region13: #{tpu_custom_call.1} parent=11 // pred_check
          %p287 = pneg %p111
        $region14: #{tpu_custom_call.1} parent=11 // pred_check_branch
          %289 = sbr.rel (%p287) target = $region16
        $region15: #{tpu_custom_call.1} parent=11 // pred_region
          _
        $region16: #{tpu_custom_call.1} parent=11 // pred_fallthru
          _
        // Predicated region
        $region17: #{tpu_custom_call.1} parent=11 // pred_check
          %p290 = pneg %p132
        $region18: #{tpu_custom_call.1} parent=11 // pred_check_branch
          %292 = sbr.rel (%p290) target = $region20
        $region19: #{tpu_custom_call.1} parent=11 // pred_region
          _
        $region20: #{tpu_custom_call.1} parent=11 // pred_fallthru
          _
        // Predicated region
        $region21: #{tpu_custom_call.1} parent=11 // pred_check
          %p293 = pneg %p153
        $region22: #{tpu_custom_call.1} parent=11 // pred_check_branch
          %295 = sbr.rel (%p293) target = $region24
        $region23: #{tpu_custom_call.1} parent=11 // pred_region
          _
        $region24: #{tpu_custom_call.1} parent=11 // pred_fallthru
          _
        // Predicated region
        $region25: #{tpu_custom_call.1} parent=11 // pred_check
          %p296 = pneg %p174
        $region26: #{tpu_custom_call.1} parent=11 // pred_check_branch
          %298 = sbr.rel (%p296) target = $region28
        $region27: #{tpu_custom_call.1} parent=11 // pred_region
          _
        $region28: #{tpu_custom_call.1} parent=11 // pred_fallthru
          _
        // Predicated region
        $region29: #{tpu_custom_call.1} parent=11 // pred_check
          %p299 = pneg %p195
        $region30: #{tpu_custom_call.1} parent=11 // pred_check_branch
          %301 = sbr.rel (%p299) target = $region32
        $region31: #{tpu_custom_call.1} parent=11 // pred_region
          %303 = vsyncadd [#allocation8], 0
          %s304 = sshll.u32 %s6, 4
          %s305 = int_to_ptr.hbm [resolvable:$true] %s304
          %s306 = sshll.u32 [#allocation7], 4
          %s307 = int_to_ptr.vmem [resolvable:$true] %s306
          %312 = dma.hbm_to_vmem [thread:$0]  %s305, 128, %s307, [#allocation8], 64, 64, 4
        $region32: #{tpu_custom_call.1} parent=11 // pred_fallthru
          _
        // Predicated region
        $region33: #{tpu_custom_call.1} parent=11 // pred_check
          %p313 = pneg %p216
        $region34: #{tpu_custom_call.1} parent=11 // pred_check_branch
          %315 = sbr.rel (%p313) target = $region36
        $region35: #{tpu_custom_call.1} parent=11 // pred_region
          _
        $region36: #{tpu_custom_call.1} parent=11 // pred_fallthru
          _
      $region12: #{tpu_custom_call.1} parent=5 // pred_fallthru
        _
      %p316 = scmp.lt.s32.totalorder %s26, 2
      // Predicated region
      $region37: #{tpu_custom_call.1} parent=5 // pred_check
        %p317 = pneg %p316
      $region38: #{tpu_custom_call.1} parent=5 // pred_check_branch
        %319 = sbr.rel (%p317) target = $region40
      $region39: #{tpu_custom_call.1} parent=5 // pred_region
        // Predicated region
        $region41: #{tpu_custom_call.1} parent=39 // pred_check
          %p320 = pneg %p58
        $region42: #{tpu_custom_call.1} parent=39 // pred_check_branch
          %322 = sbr.rel (%p320) target = $region44
        $region43: #{tpu_custom_call.1} parent=39 // pred_region
          %s323 = sand.u32 %s48, 1
          %s324 = scalar_lea.sflag [#allocation5], %s323
          %s325 = sand.u32 %s48, 1
          %s326 = smul.addr %s325, 8
          %s327 = scalar_lea.vmem [#allocation4], %s326
          %329 = vsyncadd %s324, 0
          %s330 = smul.addr %s33, 2
          %s331 = smul.addr %s330, 4
          %s332 = scalar_lea.hbm %s0, %s331
          %s333 = sshll.u32 %s332, 4
          %s334 = int_to_ptr.hbm [resolvable:$true] %s333
          %s335 = sshll.u32 %s327, 4
          %s336 = int_to_ptr.vmem [resolvable:$true] %s335
          %341 = dma.hbm_to_vmem [thread:$0]  %s334, 128, %s336, %s324, 64, 64, 4
        $region44: #{tpu_custom_call.1} parent=39 // pred_fallthru
          _
        // Predicated region
        $region45: #{tpu_custom_call.1} parent=39 // pred_check
          %p342 = pneg %p84
        $region46: #{tpu_custom_call.1} parent=39 // pred_check_branch
          %344 = sbr.rel (%p342) target = $region48
        $region47: #{tpu_custom_call.1} parent=39 // pred_region
          %p345 = scmp.lt.s32.totalorder %s33, 1
          %s346 = scalar_select %p345, %s33, 1
          %s347 = smul.addr %s346, 4
          %s348 = scalar_lea.vmem %s1, %s347
        $region48: #{tpu_custom_call.1} parent=39 // pred_fallthru
          _
      $region40: #{tpu_custom_call.1} parent=5 // pred_fallthru
        _
      %p349 = scmp.le.s32.totalorder 1, %s26
      %p350 = scmp.lt.s32.totalorder %s26, 3
      %p351 = pnand %p349, %p350
      %p352 = pneg %p351
      // Predicated region
      $region49: #{tpu_custom_call.1} parent=5 // pred_check
        _
      $region50: #{tpu_custom_call.1} parent=5 // pred_check_branch
        %354 = sbr.rel (%p351) target = $region52
      $region51: #{tpu_custom_call.1} parent=5 // pred_region
        %s355 = ssub.s32 %s26, 1
        %s356 = sand.u32 %s51, 1
        %s357 = scalar_lea.sflag [#allocation5], %s356
        %s358 = sand.u32 %s51, 1
        %s359 = smul.addr %s358, 8
        %s360 = scalar_lea.vmem [#allocation4], %s359
        // Predicated region
        $region53: #{tpu_custom_call.1} parent=51 // pred_check
          %p361 = pneg %p64
        $region54: #{tpu_custom_call.1} parent=51 // pred_check_branch
          %363 = sbr.rel (%p361) target = $region56
        $region55: #{tpu_custom_call.1} parent=51 // pred_region
          %365 = dma.done %s357, 128
        $region56: #{tpu_custom_call.1} parent=51 // pred_fallthru
          _
        // Predicated region
        $region57: #{tpu_custom_call.1} parent=51 // pred_check
          %p366 = pneg %p195
        $region58: #{tpu_custom_call.1} parent=51 // pred_check_branch
          %368 = sbr.rel (%p366) target = $region60
        $region59: #{tpu_custom_call.1} parent=51 // pred_region
          %370 = dma.done [#allocation8], 128
        $region60: #{tpu_custom_call.1} parent=51 // pred_fallthru
          _
        %s371 = sand.u32 %s51, 1
        %s372 = scalar_lea.sflag [#allocation5], %s371
        %s373 = sand.u32 %s51, 1
        %s374 = smul.addr %s373, 8
        %s375 = scalar_lea.vmem [#allocation4], %s374
        %p376 = pneg %p64
        %p377 = pneg %p61
        %p378 = scmp.lt.s32.totalorder %s35, 1
        %s379 = scalar_select %p378, %s35, 1
        %s380 = smul.addr %s379, 4
        %s381 = scalar_lea.vmem %s1, %s380
        %p382 = pneg %p90
        %p383 = pneg %p87
        %p384 = pneg %p111
        %p385 = pneg %p108
        %p386 = pneg %p132
        %p387 = pneg %p129
        %p388 = pneg %p153
        %p389 = pneg %p150
        %p390 = pneg %p174
        %p391 = pneg %p171
        %p392 = pneg %p195
        %p393 = pneg %p192
        %p394 = pneg %p216
        %p395 = pneg %p213
        %p396 = pneg %p244
        %p397 = pneg %p241
        %s398 = sand.u32 %s231, 1
        %s399 = scalar_lea.sflag [#allocation6], %s398
        %s400 = sand.u32 %s231, 1
        %s401 = smul.addr %s400, 16
        %s402 = scalar_lea.vmem [#allocation9], %s401
        %p403 = pneg %p272
        %p404 = pneg %p269
        %s405 = sand.u32 %s259, 1
        %s406 = scalar_lea.sflag [#allocation11], %s405
        %s407 = sand.u32 %s259, 1
        %s408 = smul.addr %s407, 16
        %s409 = scalar_lea.vmem [#allocation10], %s408
        %p410 = scmp.lt.s32.totalorder %s35, 1
        %s411 = scalar_select %p410, %s35, 1
        %s412 = smul.addr %s411, 4
        %s413 = scalar_lea.vmem %s1, %s412
        %s414 = smul.u32 2, %s36
        %s415 = smul.u32 2, %s36
        %p417 = scmp.eq.s32.totalorder %s36, 0
        // Predicated region
        $region61: #{tpu_custom_call.1} parent=51 // pred_check
          %p418 = pneg %p417
        $region62: #{tpu_custom_call.1} parent=51 // pred_check_branch
          %420 = sbr.rel (%p418) target = $region64
        $region63: #{tpu_custom_call.1} parent=51 // pred_region
          %v421 = vld [vmem:[%s4] sm:$0x1]
          %v422 = vld [vmem:[%s413] sm:$0xf]
          %v423 = vld [vmem:[%s5] sm:$0x3]
          %425 = vset.pattern.permute.xlu0 0
          %426 = vperm.xlu0 %425, %v423
          %v427 = vpop.permute.xlu0 %426
          %vm429 = vcmask 64512
          %v431 = vsel %vm429, %v421, 0
          %vm433 = vcmask 1043456
          %v435 = vsel %vm433, %v422, 0
          %437 = vmatpush.bf16.msra.mxu0 0
          %438 = vmatpush.bf16.msra.mxu0 0
          %439 = vmatpush.bf16.msra.mxu0 0
          %440 = vmatpush.bf16.msra.mxu0 0
          %441 = vmatpush.bf16.msra.mxu0 0
          %442 = vmatpush.bf16.msra.mxu0 0
          %443 = vmatpush.bf16.msra.mxu0 0
          %444 = vmatpush.bf16.msra.mxu0 %v435
          %445 = vmatmul.bf16.gmra.mxu0 %v431
          %v446 = vpop.f32.mrf.mxu0
          %v447 = vadd.f32 %v427, %v446
          %v448 = vpop.f32.mrf.mxu0
          %449 = vdwg.mxu0
          %v450 = vpack.c.bf16 %v447, %v447
          %vm451 = vcmask 122880
          %452 = vst.msk [vmem:[#allocation2] sm:$0x1] %vm451, %v450
          %v453 = vld [vmem:[%s360] sm:$0xf]
          %v454 = vld [vmem:[%s360 + $0x4] sm:$0xf]
          %v455 = vld [vmem:[#allocation7] sm:$0xf]
          %v456 = vld [vmem:[#allocation7 + $0x4] sm:$0xf]
          %v457 = vld [vmem:[%s7] sm:$0x1]
          %v459 = vperm.slane %v457, 0
          %v463 = vunpack.c.l.b16 %v453
          %v464 = vunpack.c.l.b16 %v454
          %v465 = vpack.c.b16 %v464, %v463
          %v468 = vunpack.c.l.b16 %v455
          %v469 = vunpack.c.l.b16 %v456
          %v470 = vpack.c.b16 %v469, %v468
          %vm472 = vcmask 130048
          %v474 = vsel %vm472, %v465, 0
          %476 = vmatpush.bf16.msra.mxu0 0
          %477 = vmatpush.bf16.msra.mxu0 0
          %478 = vmatpush.bf16.msra.mxu0 0
          %479 = vmatpush.bf16.msra.mxu0 0
          %480 = vmatpush.bf16.msra.mxu0 0
          %481 = vmatpush.bf16.msra.mxu0 0
          %482 = vmatpush.bf16.msra.mxu0 0
          %483 = vmatpush.bf16.msra.mxu0 %v470
          %484 = vmatmul.bf16.gmra.mxu0 %v474
          %v485 = vpop.f32.mrf.mxu0
          %v486 = vadd.f32 %v459, %v485
          %v487 = vpop.f32.mrf.mxu0
          %v488 = vadd.f32 %v459, %v487
          %489 = vdwg.mxu0
          %v490 = vpack.c.bf16 %v486, %v486
          %v491 = vpack.c.bf16 %v488, %v488
          %vm492 = vcmask 125952
          %493 = vst.msk [vmem:[#allocation3] sm:$0xf] %vm492, %v490
          %494 = vst.msk [vmem:[#allocation3 + $0x4] sm:$0xf] %vm492, %v491
        $region64: #{tpu_custom_call.1} parent=51 // pred_fallthru
          _
        %s495 = smul.u32 %s36, 16
        %s496 = sshra.s32 %s495, 3
        %s497 = sand.u32 %s495, 7
        %s498 = smul.addr %s496, 4
        %s499 = scalar_lea.vmem %s360, %s498 [#allocation4]
        %v500 = vld [vmem:[%s499] sm:$0xf]
        %v501 = vld [vmem:[%s499 + $0x4] sm:$0xf]
        %v502 = vld [vmem:[%s2] sm:$0xf]
        %v503 = vld [vmem:[%s2 + $0x4] sm:$0xf]
        %v504 = vld [vmem:[%s3] sm:$0x1]
        %v506 = vperm.slane %v504, 0
        %v510 = vunpack.c.l.b16 %v500
        %v511 = vunpack.c.l.b16 %v501
        %v512 = vpack.c.b16 %v511, %v510
        %v515 = vunpack.c.l.b16 %v502
        %v516 = vunpack.c.l.b16 %v503
        %v517 = vpack.c.b16 %v516, %v515
        %vm519 = vcmask 130048
        %v521 = vsel %vm519, %v512, 0
        %523 = vmatpush.bf16.msra.mxu0 0
        %524 = vmatpush.bf16.msra.mxu0 0
        %525 = vmatpush.bf16.msra.mxu0 0
        %526 = vmatpush.bf16.msra.mxu0 0
        %527 = vmatpush.bf16.msra.mxu0 0
        %528 = vmatpush.bf16.msra.mxu0 0
        %529 = vmatpush.bf16.msra.mxu0 0
        %530 = vmatpush.bf16.msra.mxu0 %v517
        %531 = vmatmul.bf16.gmra.mxu0 %v521
        %v532 = vpop.f32.mrf.mxu0
        %v533 = vadd.f32 %v506, %v532
        %v534 = vpop.f32.mrf.mxu0
        %v535 = vadd.f32 %v506, %v534
        %536 = vdwg.mxu0
        %v537 = vpack.c.bf16 %v535, %v533
        %v538 = vld [vmem:[#allocation2] sm:$0x1]
        %vm539 = vcmask 15360
        %v541 = vsel %vm539, %v537, 0
        %vm543 = vcmask 1040384
        %v545 = vsel %vm543, %v538, 0
        %547 = vmatpush.bf16.msra.mxu0 0
        %548 = vmatpush.bf16.msra.mxu0 0
        %549 = vmatpush.bf16.msra.mxu0 0
        %550 = vmatpush.bf16.msra.mxu0 0
        %551 = vmatpush.bf16.msra.mxu0 0
        %552 = vmatpush.bf16.msra.mxu0 0
        %553 = vmatpush.bf16.msra.mxu0 0
        %554 = vmatpush.bf16.msra.mxu0 %v545
        %555 = vmatmul.bf16.gmra.mxu0 %v541
        %v556 = vpop.f32.mrf.mxu0
        %v557 = vadd.f32 0.0, %v556
        %v558 = vpop.f32.mrf.mxu0
        %v559 = vadd.f32 0.0, %v558
        %560 = vdwg.mxu0
        %v561 = vsel %vm519, %v557, -inf
        %562 = vmax.xlane.f32.xlu0 %v561
        %v563 = vpop.xlane.xlu0 %562
        %v564 = vsel %vm519, %v559, -inf
        %565 = vmax.xlane.f32.xlu0 %v564
        %v566 = vpop.xlane.xlu0 %565
        %v567 = vsub.f32 %v557, %v563
        %v568 = vsub.f32 %v559, %v566
        %v569 = vmul.f32 %v567, 1.442695
        %v570 = vpow.pop %v569
        %v571 = vmul.f32 %v568, 1.442695
        %v572 = vpow.pop %v571
        %v573 = vsel %vm519, %v570, 0.0
        %574 = vadd.xlane.f32.xlu0 %v573
        %v575 = vpop.xlane.xlu0 %574
        %v576 = vsel %vm519, %v572, 0.0
        %577 = vadd.xlane.f32.xlu0 %v576
        %v578 = vpop.xlane.xlu0 %577
        %v579 = vrcp.pop %v575
        %v580 = vrcp.pop %v578
        %v581 = vmul.f32 %v570, %v579
        %v582 = vmul.f32 %v572, %v580
        %583 = vst.msk [vmem:[%s409] sm:$0xff] %vm519, %v581
        %584 = vst.msk [vmem:[%s409 + $0x8] sm:$0xff] %vm519, %v582
        %v585 = vpack.c.bf16 %v582, %v581
        %v586 = vld [vmem:[#allocation3] sm:$0xf]
        %v587 = vld [vmem:[#allocation3 + $0x4] sm:$0xf]
        %v590 = vunpack.c.l.b16 %v586
        %v591 = vunpack.c.l.b16 %v587
        %v592 = vpack.c.b16 %v591, %v590
        %v595 = vsel %vm519, %v585, 0
        %597 = vmatpush.bf16.msra.mxu0 0
        %598 = vmatpush.bf16.msra.mxu0 0
        %599 = vmatpush.bf16.msra.mxu0 0
        %600 = vmatpush.bf16.msra.mxu0 0
        %601 = vmatpush.bf16.msra.mxu0 0
        %602 = vmatpush.bf16.msra.mxu0 0
        %603 = vmatpush.bf16.msra.mxu0 0
        %604 = vmatpush.bf16.msra.mxu0 %v592
        %605 = vmatmul.bf16.gmra.mxu0 %v595
        %v606 = vpop.f32.mrf.mxu0
        %v607 = vadd.f32 0.0, %v606
        %v608 = vpop.f32.mrf.mxu0
        %v609 = vadd.f32 0.0, %v608
        %610 = vdwg.mxu0
        %611 = vst.msk [vmem:[%s402] sm:$0xff] %vm519, %v607
        %612 = vst.msk [vmem:[%s402 + $0x8] sm:$0xff] %vm519, %v609
        %s613 = sand.u32 %s231, 1
        %s614 = scalar_lea.sflag [#allocation6], %s613
        %s615 = sand.u32 %s231, 1
        %s616 = smul.addr %s615, 16
        %s617 = scalar_lea.vmem [#allocation9], %s616
        %s618 = sand.u32 %s259, 1
        %s619 = scalar_lea.sflag [#allocation11], %s618
        %s620 = sand.u32 %s259, 1
        %s621 = smul.addr %s620, 16
        %s622 = scalar_lea.vmem [#allocation10], %s621
        // Predicated region
        $region65: #{tpu_custom_call.1} parent=51 // pred_check
          %p623 = pneg %p241
        $region66: #{tpu_custom_call.1} parent=51 // pred_check_branch
          %625 = sbr.rel (%p623) target = $region68
        $region67: #{tpu_custom_call.1} parent=51 // pred_region
          %s626 = smul.u32 2, %s36
          %628 = vsyncadd %s614, 0
          %s629 = smul.addr %s35, 2
          %s630 = sadd.s32 %s626, %s629
          %s631 = smul.addr %s630, 8
          %s632 = scalar_lea.hbm %s8, %s631
          %s633 = sshll.u32 %s617, 4
          %s634 = int_to_ptr.vmem [resolvable:$true] %s633
          %s635 = sshll.u32 %s632, 4
          %s636 = int_to_ptr.hbm [resolvable:$true] %s635
          %641 = dma.vmem_to_hbm [thread:$0]  %s634, 256, %s636, %s614, 128, 128, 8
        $region68: #{tpu_custom_call.1} parent=51 // pred_fallthru
          _
        // Predicated region
        $region69: #{tpu_custom_call.1} parent=51 // pred_check
          %p642 = pneg %p269
        $region70: #{tpu_custom_call.1} parent=51 // pred_check_branch
          %644 = sbr.rel (%p642) target = $region72
        $region71: #{tpu_custom_call.1} parent=51 // pred_region
          %s645 = smul.u32 2, %s36
          %647 = vsyncadd %s619, 0
          %s648 = smul.addr %s35, 2
          %s649 = sadd.s32 %s645, %s648
          %s650 = smul.addr %s649, 8
          %s651 = scalar_lea.hbm %s9, %s650
          %s652 = sshll.u32 %s622, 4
          %s653 = int_to_ptr.vmem [resolvable:$true] %s652
          %s654 = sshll.u32 %s651, 4
          %s655 = int_to_ptr.hbm [resolvable:$true] %s654
          %660 = dma.vmem_to_hbm [thread:$0]  %s653, 256, %s655, %s619, 128, 128, 8
        $region72: #{tpu_custom_call.1} parent=51 // pred_fallthru
          _
      $region52: #{tpu_custom_call.1} parent=5 // pred_fallthru
        _
      %p661 = scmp.le.s32.totalorder 2, %s26
      // Predicated region
      $region73: #{tpu_custom_call.1} parent=5 // pred_check
        %p662 = pneg %p661
      $region74: #{tpu_custom_call.1} parent=5 // pred_check_branch
        %664 = sbr.rel (%p662) target = $region76
      $region75: #{tpu_custom_call.1} parent=5 // pred_region
        %s665 = ssub.s32 %s26, 2
        // Predicated region
        $region77: #{tpu_custom_call.1} parent=75 // pred_check
          %p666 = pneg %p247
        $region78: #{tpu_custom_call.1} parent=75 // pred_check_branch
          %668 = sbr.rel (%p666) target = $region80
        $region79: #{tpu_custom_call.1} parent=75 // pred_region
          %s669 = sand.u32 %s232, 1
          %s670 = scalar_lea.sflag [#allocation6], %s669
          %s671 = sand.u32 %s232, 1
          %s672 = smul.addr %s671, 16
          %s673 = scalar_lea.vmem [#allocation9], %s672
          %675 = dma.done %s670, 256
        $region80: #{tpu_custom_call.1} parent=75 // pred_fallthru
          _
        // Predicated region
        $region81: #{tpu_custom_call.1} parent=75 // pred_check
          %p676 = pneg %p275
        $region82: #{tpu_custom_call.1} parent=75 // pred_check_branch
          %678 = sbr.rel (%p676) target = $region84
        $region83: #{tpu_custom_call.1} parent=75 // pred_region
          %s679 = sand.u32 %s260, 1
          %s680 = scalar_lea.sflag [#allocation11], %s679
          %s681 = sand.u32 %s260, 1
          %s682 = smul.addr %s681, 16
          %s683 = scalar_lea.vmem [#allocation10], %s682
          %685 = dma.done %s680, 256
        $region84: #{tpu_custom_call.1} parent=75 // pred_fallthru
          _
      $region76: #{tpu_custom_call.1} parent=5 // pred_fallthru
        _
    $region6: #{tpu_custom_call.1} parent=1 // loop_footer
      %s30 = sadd.s32 1, %s26
    $region7: #{tpu_custom_call.1} parent=1 // loop_footer_branch
      %25 = sbr.rel target = $region3
    $region8: #{tpu_custom_call.1} parent=1 // loop_exit
      _
    %686 = vsyncpa [#allocation5], 1
    %s687 = scalar_lea.sflag [#allocation5], 1
    %688 = vsyncpa %s687, 1
    %689 = vsyncpa [#allocation8], 1
    %690 = vsyncpa [#allocation6], 1
    %s691 = scalar_lea.sflag [#allocation6], 1
    %692 = vsyncpa %s691, 1
    %693 = vsyncpa [#allocation11], 1
    %s694 = scalar_lea.sflag [#allocation11], 1
    %695 = vsyncpa %s694, 1

</llo_original>
